<compile_context>
chip_gen: v6e
topology: v6e:2x2x1
jax: 0.10.0
libtpu: 0.0.40
codegen_flags: <defaults>
</compile_context>

<pallas_src>
import jax
import jax.numpy as jnp
from jax.experimental import pallas as pl
from jax.experimental.pallas import tpu as pltpu


def _pe2d_kernel(x_ref, pos_ref, o_ref):
    # x_ref / o_ref : (tb, C)    pos_ref : (1, C)  -> broadcast over tb.
    o_ref[...] = (x_ref[...].astype(jnp.float32)
                  + pos_ref[...].astype(jnp.float32)).astype(o_ref.dtype)
    # TODO(synk): training-mode dropout (pltpu.stateful_bernoulli) not emitted;
    # forward here matches module.eval().


def _divisors(n):
    out = []
    d = 1
    while d * d <= n:
        if n % d == 0:
            out.append(d)
            if d != n // d:
                out.append(n // d)
        d += 1
    return sorted(out)


def _pick_tiles(B, F, x_itemsize, pos_itemsize,
                target_block_bytes=2 << 20, vmem_budget_bytes=12 << 20):
    """Pick (tb, C): batch tile and lane chunk for the flattened [B, F] view.

    tb: divisor of B that is a multiple of the dtype's sublane pack (8 f32 /
        16 bf16 / 32 int8) or the full batch.
    C : divisor of F that is a multiple of 128 (or F itself), sized so one
        x block is ~2 MiB and total double-buffered VMEM (x, out, f32 pos)
        stays well under the smallest default scoped-VMEM limit (v5e: 16 MiB).
    """
    align = {4: 8, 2: 16, 1: 32}.get(x_itemsize, 8)

    tb_opts = sorted({d for d in _divisors(B) if d % align == 0 or d == B})
    c_opts = sorted({d for d in _divisors(F) if d % 128 == 0 or d == F})

    def x_bytes(tb, c):
        return tb * c * x_itemsize

    def vmem_bytes(tb, c):
        # double-buffered x-in, out and pos blocks
        return 2 * (2 * x_bytes(tb, c) + c * pos_itemsize)

    # Smallest batch tile that still fills the sublanes (or the whole batch).
    tb = min(tb_opts)

    # Largest contiguous lane chunk inside the per-block / VMEM budgets.
    fitting = [c for c in c_opts
               if x_bytes(tb, c) <= target_block_bytes
               and vmem_bytes(tb, c) <= vmem_budget_bytes]
    if fitting:
        C = max(fitting)
    else:
        # Relax lane alignment rather than blow the scoped-VMEM limit
        # (robustness for pathological F with no 128-multiple divisor).
        any_c = _divisors(F)
        fitting_any = [c for c in any_c if vmem_bytes(tb, c) <= vmem_budget_bytes]
        C = max(fitting_any) if fitting_any else min(any_c)

    # Grow the batch tile while the block stays inside the budgets.
    for t in sorted(tb_opts, reverse=True):
        if (x_bytes(t, C) <= target_block_bytes
                and vmem_bytes(t, C) <= vmem_budget_bytes):
            tb = max(tb, t)
            break

    # v7x megacore: guarantee >=2 grid blocks along a "parallel" axis when the
    # problem is divisible, so both TensorCores get work.
    if (F // C) * (B // tb) < 2:
        smaller_c = [c for c in c_opts if c < C]
        smaller_tb = [t for t in tb_opts if t < tb]
        if smaller_c:
            C = max(smaller_c)
        elif smaller_tb:
            tb = max(smaller_tb)

    return tb, C


def learned_positional_encoding_2d(x, row_embed, col_embed, *,
                                   force_pallas=False):
    """x: [B, S, E], row_embed: [nx, E], col_embed: [ny, E] -> [B, S, E]."""
    B, S, E = x.shape
    nx, _ = row_embed.shape
    ny, _ = col_embed.shape
    assert S == nx * ny, f"Expected sequence length {nx * ny} but got {S}"

    F = S * E
    # pos[r*ny + c, e] = row_embed[r, e] + col_embed[c, e]; tiny, built once
    # in the wrapper (B times smaller than x), kept in the param dtype (f32).
    pos = (row_embed[:, None, :] + col_embed[None, :, :]).reshape(1, F)

    # Free (contiguous) reshape to the fully lane-dense per-batch layout.
    x2 = x.reshape(B, F)

    x_isz = jnp.dtype(x.dtype).itemsize
    pos_isz = jnp.dtype(pos.dtype).itemsize

    # Tiny problems are dominated by fixed overheads (launch, pos build); a
    # fused XLA add is already at roofline there.
    if not force_pallas and B * F * x_isz < (1 << 20):
        out2 = (x2.astype(jnp.float32) + pos.astype(jnp.float32)).astype(x.dtype)
        return out2.reshape(B, S, E)

    tb, C = _pick_tiles(B, F, x_isz, pos_isz)
    grid = (F // C, B // tb)   # lane-chunk axis outermost -> pos rarely re-DMA'd

    out2 = pl.pallas_call(
        _pe2d_kernel,
        out_shape=jax.ShapeDtypeStruct((B, F), x.dtype),
        grid_spec=pltpu.PrefetchScalarGridSpec(
            num_scalar_prefetch=0,
            grid=grid,
            in_specs=[
                # x block: tb batch rows, one contiguous 128-multiple lane chunk.
                pl.BlockSpec((tb, C), lambda i, j: (j, i)),
                # pos block: only re-fetched when the lane-chunk index changes.
                pl.BlockSpec((1, C), lambda i, j: (0, i)),
            ],
            out_specs=pl.BlockSpec((tb, C), lambda i, j: (j, i)),
        ),
        compiler_params=pltpu.CompilerParams(
            dimension_semantics=("parallel", "parallel")),
    )(x2, pos)

    return out2.reshape(B, S, E)


def _reference(x, row_embed, col_embed):
    B, S, E = x.shape
    nx = row_embed.shape[0]
    ny = col_embed.shape[0]
    rows = jnp.repeat(jnp.arange(nx), ny)          # [S]
    cols = jnp.tile(jnp.arange(ny), nx)            # [S]
    pos = row_embed[rows] + col_embed[cols]        # [S, E]
    return x + pos[None]


if __name__ == "__main__":
    # Small deterministic example: nx=4, ny=4 -> seq_len=16, emb=32, batch=2.
    B, nx, ny, E = 2, 4, 4, 32
    S = nx * ny

    key = jax.random.PRNGKey(0)
    kx, kr, kc = jax.random.split(key, 3)
    x = jax.random.normal(kx, (B, S, E), dtype=jnp.float32)
    row_embed = jax.random.normal(kr, (nx, E), dtype=jnp.float32)  # torch.randn analogue
    col_embed = jax.random.normal(kc, (ny, E), dtype=jnp.float32)

    ref = _reference(x, row_embed, col_embed)

    # f32 path through the Pallas kernel (force past the tiny-input fallback).
    out = learned_positional_encoding_2d(x, row_embed, col_embed,
                                         force_pallas=True)
    out = jax.block_until_ready(out)
    assert out.shape == (B, S, E)
    assert jnp.allclose(out, ref, atol=1e-6, rtol=1e-6)

    # Auto path (tiny input -> fused XLA fallback) must agree too.
    out_auto = jax.block_until_ready(
        learned_positional_encoding_2d(x, row_embed, col_embed))
    assert jnp.allclose(out_auto, ref, atol=1e-6, rtol=1e-6)

    # bf16 activations with f32 params: add happens in f32, cast at the end.
    x_bf16 = x.astype(jnp.bfloat16)
    out_bf16 = learned_positional_encoding_2d(x_bf16, row_embed, col_embed,
                                              force_pallas=True)
    out_bf16 = jax.block_until_ready(out_bf16)
    ref_bf16 = _reference(x_bf16.astype(jnp.float32), row_embed,
                          col_embed).astype(jnp.bfloat16)
    assert out_bf16.dtype == jnp.bfloat16
    assert jnp.allclose(out_bf16.astype(jnp.float32),
                        ref_bf16.astype(jnp.float32), atol=1e-2, rtol=1e-2)

    print("KERNEL_OK")
</pallas_src>

<mosaic_0001>
module attributes {stable_mosaic.version = 11 : i64} {
  func.func @_pe2d_kernel(%arg0: i32, %arg1: i32, %arg2: memref<2x256xf32, #tpu.memory_space<vmem>>, %arg3: memref<1x256xf32, #tpu.memory_space<vmem>>, %arg4: memref<2x256xf32, #tpu.memory_space<vmem>>) attributes {dimension_semantics = [#tpu.dimension_semantics<parallel>, #tpu.dimension_semantics<parallel>], iteration_bounds = array<i64: 2, 1>, scalar_prefetch = 0 : i64, scratch_operands = 0 : i64, tpu.core_type = #tpu.core_type<tc>, window_params = [{transform_indices = @transform_0, window_bounds = array<i64: 2, 256>}, {transform_indices = @transform_1, window_bounds = array<i64: 1, 256>}, {transform_indices = @transform_2, window_bounds = array<i64: 2, 256>}]} {
    %c0 = arith.constant 0 : index
    %c0_0 = arith.constant 0 : index
    %0 = vector.load %arg2[%c0, %c0_0] : memref<2x256xf32, #tpu.memory_space<vmem>>, vector<2x256xf32>
    %c0_1 = arith.constant 0 : index
    %c0_2 = arith.constant 0 : index
    %1 = vector.load %arg3[%c0_1, %c0_2] : memref<1x256xf32, #tpu.memory_space<vmem>>, vector<1x256xf32>
    %2 = vector.broadcast %1 : vector<1x256xf32> to vector<2x256xf32>
    %3 = arith.addf %0, %2 : vector<2x256xf32>
    %c0_3 = arith.constant 0 : index
    %c0_4 = arith.constant 0 : index
    %4 = vector.load %arg4[%c0_3, %c0_4] : memref<2x256xf32, #tpu.memory_space<vmem>>, vector<2x256xf32>
    tpu.vector_store %arg4[%c0_3, %c0_4], %3 {strides = array<i32>} : memref<2x256xf32, #tpu.memory_space<vmem>>, vector<2x256xf32>,
    return
  }
  func.func @transform_0(%arg0: i32, %arg1: i32) -> (i32, i32) {
    %c0_i32 = arith.constant 0 : i32
    return %arg1, %arg0 : i32, i32
  }
  func.func @transform_1(%arg0: i32, %arg1: i32) -> (i32, i32) {
    %c0_i32 = arith.constant 0 : i32
    %c0_i32_0 = arith.constant 0 : i32
    return %c0_i32, %arg0 : i32, i32
  }
  func.func @transform_2(%arg0: i32, %arg1: i32) -> (i32, i32) {
    %c0_i32 = arith.constant 0 : i32
    return %arg1, %arg0 : i32, i32
  }
}

</mosaic_0001>

<llo_original>
// kernel: tpu_custom_call.1
$region0: #{tpu_custom_call.1}
  #allocation0 [shape = 'u32[]', space=smem, size = 0x4, offset = 0x4, fixed_abs, tag = 'smem constant byte address 0x4 - core index']
  #allocation1 [shape = 'u32[144,128]{1,0:T(1,128)}', space=vmem, size = 0x12000, scoped, tag = 'internal scratch']
  %s0 = inlined_call_operand.hbm [shape: f32[2,512], index: 0, kind: input, shape index: {}]
  %s1 = inlined_call_operand.hbm [shape: f32[1,512], index: 1, kind: input, shape index: {}]
  %s2 = inlined_call_operand.hbm [shape: f32[2,512], index: 2, kind: output, shape index: {}]
  %s3 = sld [smem:[#allocation0]]
  $region49: #{tpu_custom_call.1} parent=0
    _
  %s5 = ssub.s32 1, %s3
  %s6 = scalar_select 0, %s5, %s3
  $region1: #{tpu_custom_call.1} parent=0
    #allocation2 [shape = 'u8[4096]{0}', space=vmem, size = 0x1000, scoped, tag = 'input window, operand 0']
    #allocation3 [shape = 's32[2]{0}', space=sflag, size = 0x8, scoped, tag = 'scoped memory for tpu_custom_call.1']
    #allocation4 [shape = 's32[2]{0}', space=sflag, size = 0x8, scoped, tag = 'scoped memory for tpu_custom_call.1']
    #allocation5 [shape = 'u8[2048]{0}', space=vmem, size = 0x800, scoped, tag = 'input window, operand 1']
    #allocation6 [shape = 's32[2]{0}', space=sflag, size = 0x8, scoped, tag = 'scoped memory for tpu_custom_call.1']
    #allocation7 [shape = 'u8[4096]{0}', space=vmem, size = 0x1000, scoped, tag = 'output window, operand 0']
    %7 = vsyncpa [#allocation3], 0
    %s8 = scalar_lea.sflag [#allocation3], 1
    %9 = vsyncpa %s8, 0
    %10 = vsyncpa [#allocation6], 0
    %s11 = scalar_lea.sflag [#allocation6], 1
    %12 = vsyncpa %s11, 0
    %13 = vsyncpa [#allocation4], 0
    %s14 = scalar_lea.sflag [#allocation4], 1
    %15 = vsyncpa %s14, 0
    loop: start=0, step=1, limit=4
    $region2: #{tpu_custom_call.1} parent=1 // loop_pre_header
      _
    $region3: #{tpu_custom_call.1} parent=1 // loop_header
      %s17 = sphi 0, %s21
      %p18 = scmp.ge.s32.totalorder %s17, 4
      %s24 = sphi 0, %s36
      %s25 = sphi 0, %s32
      %s26 = sphi 0, %s24
      %s27 = sphi 0, %s25
      %s28 = sphi 0, %s26
      %s29 = sphi 0, %s27
      %s41 = sphi 0, %s43
      %s44 = sphi 0, %s41
      %s45 = sphi 0, %s44
      %s61 = sphi 0, %s45
      %s67 = sphi 0, %s69
      %s70 = sphi 0, %s67
      %s71 = sphi 0, %s70
      %s87 = sphi 0, %s71
      %s95 = sphi 0, %s97
      %s98 = sphi 0, %s95
      %s99 = sphi 0, %s98
      %s115 = sphi 0, %s99
    $region4: #{tpu_custom_call.1} parent=1 // loop_header_branch
      %20 = sbr.rel (%p18) target = $region8
    $region5: #{tpu_custom_call.1} parent=1 // loop_body
      %s22 = ssub.s32 %s17, 1
      %s23 = ssub.s32 %s17, 2
      %s30 = sadd.s32 1, %s25
      %p31 = scmp.ge.s32.totalorder %s30, 1
      %s32 = scalar_select %p31, 0, %s30
      %s33 = sadd.s32 1, %s24
      %s34 = scalar_select %p31, %s33, %s24
      %p35 = scmp.ge.s32.totalorder %s34, 2
      %s36 = scalar_select %p35, 0, %s34
      %s37 = ssub.s32 %s25, %s32
      %s38 = ssub.s32 %s24, %s36
      %s39 = sor.u32 %s37, %s38
      %p40 = scmp.eq.s32.totalorder %s39, 0
      %s42 = sadd.s32 %s41, 1
      %s43 = scalar_select %p40, %s41, %s42
      %p46 = pneg %p40
      %p47 = scmp.eq.s32.totalorder %s17, 1
      %p48 = por %p46, %p47
      %p49 = scmp.ne.s32.totalorder %s41, %s44
      %p50 = scmp.eq.s32.totalorder %s17, 0
      %p51 = por %p49, %p50
      %p52 = scmp.ne.s32.totalorder %s41, %s44
      %p53 = scmp.eq.s32.totalorder %s22, 1
      %p54 = por %p52, %p53
      %p55 = scmp.ne.s32.totalorder %s44, %s45
      %p56 = scmp.eq.s32.totalorder %s22, 0
      %p57 = por %p55, %p56
      %p58 = scmp.ne.s32.totalorder %s44, %s45
      %p59 = scmp.eq.s32.totalorder %s23, 1
      %p60 = por %p58, %p59
      %p62 = scmp.ne.s32.totalorder %s45, %s61
      %p63 = scmp.eq.s32.totalorder %s23, 0
      %p64 = por %p62, %p63
      %s65 = ssub.s32 %s24, %s36
      %p66 = scmp.eq.s32.totalorder %s65, 0
      %s68 = sadd.s32 %s67, 1
      %s69 = scalar_select %p66, %s67, %s68
      %p72 = pneg %p66
      %p73 = scmp.eq.s32.totalorder %s17, 1
      %p74 = por %p72, %p73
      %p75 = scmp.ne.s32.totalorder %s67, %s70
      %p76 = scmp.eq.s32.totalorder %s17, 0
      %p77 = por %p75, %p76
      %p78 = scmp.ne.s32.totalorder %s67, %s70
      %p79 = scmp.eq.s32.totalorder %s22, 1
      %p80 = por %p78, %p79
      %p81 = scmp.ne.s32.totalorder %s70, %s71
      %p82 = scmp.eq.s32.totalorder %s22, 0
      %p83 = por %p81, %p82
      %p84 = scmp.ne.s32.totalorder %s70, %s71
      %p85 = scmp.eq.s32.totalorder %s23, 1
      %p86 = por %p84, %p85
      %p88 = scmp.ne.s32.totalorder %s71, %s87
      %p89 = scmp.eq.s32.totalorder %s23, 0
      %p90 = por %p88, %p89
      %s91 = ssub.s32 %s25, %s32
      %s92 = ssub.s32 %s24, %s36
      %s93 = sor.u32 %s91, %s92
      %p94 = scmp.eq.s32.totalorder %s93, 0
      %s96 = sadd.s32 %s95, 1
      %s97 = scalar_select %p94, %s95, %s96
      %p100 = pneg %p94
      %p101 = scmp.eq.s32.totalorder %s17, 1
      %p102 = por %p100, %p101
      %p103 = scmp.ne.s32.totalorder %s95, %s98
      %p104 = scmp.eq.s32.totalorder %s17, 0
      %p105 = por %p103, %p104
      %p106 = scmp.ne.s32.totalorder %s95, %s98
      %p107 = scmp.eq.s32.totalorder %s22, 1
      %p108 = por %p106, %p107
      %p109 = scmp.ne.s32.totalorder %s98, %s99
      %p110 = scmp.eq.s32.totalorder %s22, 0
      %p111 = por %p109, %p110
      %p112 = scmp.ne.s32.totalorder %s98, %s99
      %p113 = scmp.eq.s32.totalorder %s23, 1
      %p114 = por %p112, %p113
      %p116 = scmp.ne.s32.totalorder %s99, %s115
      %p117 = scmp.eq.s32.totalorder %s23, 0
      %p118 = por %p116, %p117
      %p119 = scmp.le.s32.totalorder 1, %s17
      %p120 = scmp.lt.s32.totalorder %s17, 3
      %p121 = pnand %p119, %p120
      %p122 = pneg %p121
      // Predicated region
      $region9: #{tpu_custom_call.1} parent=5 // pred_check
        _
      $region10: #{tpu_custom_call.1} parent=5 // pred_check_branch
        %124 = sbr.rel (%p121) target = $region12
      $region11: #{tpu_custom_call.1} parent=5 // pred_region
        %s125 = ssub.s32 %s17, 1
      $region12: #{tpu_custom_call.1} parent=5 // pred_fallthru
        _
      %p126 = scmp.lt.s32.totalorder %s17, 2
      // Predicated region
      $region13: #{tpu_custom_call.1} parent=5 // pred_check
        %p127 = pneg %p126
      $region14: #{tpu_custom_call.1} parent=5 // pred_check_branch
        %129 = sbr.rel (%p127) target = $region16
      $region15: #{tpu_custom_call.1} parent=5 // pred_region
        // Predicated region
        $region17: #{tpu_custom_call.1} parent=15 // pred_check
          %p130 = pneg %p51
        $region18: #{tpu_custom_call.1} parent=15 // pred_check_branch
          %132 = sbr.rel (%p130) target = $region20
        $region19: #{tpu_custom_call.1} parent=15 // pred_region
          %s133 = sand.u32 %s41, 1
          %s134 = scalar_lea.sflag [#allocation3], %s133
          %s135 = sand.u32 %s41, 1
          %s136 = smul.addr %s135, 4
          %s137 = scalar_lea.vmem [#allocation2], %s136
          %s138 = smul.u32 2, %s24
          %s140 = ssub.s32 64, 64
          %141 = vsyncadd %s134, %s140
          %s142 = smul.addr %s25, 4
          %s143 = sadd.s32 %s138, %s142
          %s144 = smul.addr %s143, 32
          %s145 = scalar_lea.hbm %s0, %s144
          %s147 = sshll.u32 %s137, 4
          %s148 = int_to_ptr.vmem [resolvable:$true] %s147
          %150 = dma.hbm_to_vmem [thread:$0]  %s145, 64, %s148, %s134
        $region20: #{tpu_custom_call.1} parent=15 // pred_fallthru
          _
        // Predicated region
        $region21: #{tpu_custom_call.1} parent=15 // pred_check
          %p151 = pneg %p77
        $region22: #{tpu_custom_call.1} parent=15 // pred_check_branch
          %153 = sbr.rel (%p151) target = $region24
        $region23: #{tpu_custom_call.1} parent=15 // pred_region
          %s154 = sand.u32 %s67, 1
          %s155 = scalar_lea.sflag [#allocation6], %s154
          %s156 = sand.u32 %s67, 1
          %s157 = smul.addr %s156, 2
          %s158 = scalar_lea.vmem [#allocation5], %s157
          %s159 = smul.u32 2, %s24
          %s161 = ssub.s32 32, 32
          %162 = vsyncadd %s155, %s161
          %s163 = smul.addr %s159, 16
          %s164 = scalar_lea.hbm %s1, %s163
          %s166 = sshll.u32 %s158, 4
          %s167 = int_to_ptr.vmem [resolvable:$true] %s166
          %169 = dma.hbm_to_vmem [thread:$0]  %s164, 32, %s167, %s155
        $region24: #{tpu_custom_call.1} parent=15 // pred_fallthru
          _
      $region16: #{tpu_custom_call.1} parent=5 // pred_fallthru
        _
      %p170 = scmp.le.s32.totalorder 1, %s17
      %p171 = scmp.lt.s32.totalorder %s17, 3
      %p172 = pnand %p170, %p171
      %p173 = pneg %p172
      // Predicated region
      $region25: #{tpu_custom_call.1} parent=5 // pred_check
        _
      $region26: #{tpu_custom_call.1} parent=5 // pred_check_branch
        %175 = sbr.rel (%p172) target = $region28
      $region27: #{tpu_custom_call.1} parent=5 // pred_region
        %s176 = ssub.s32 %s17, 1
        %s177 = sand.u32 %s44, 1
        %s178 = scalar_lea.sflag [#allocation3], %s177
        %s179 = sand.u32 %s44, 1
        %s180 = smul.addr %s179, 4
        %s181 = scalar_lea.vmem [#allocation2], %s180
        // Predicated region
        $region29: #{tpu_custom_call.1} parent=27 // pred_check
          %p182 = pneg %p57
        $region30: #{tpu_custom_call.1} parent=27 // pred_check_branch
          %184 = sbr.rel (%p182) target = $region32
        $region31: #{tpu_custom_call.1} parent=27 // pred_region
          %185 = dma.done %s178, 64
        $region32: #{tpu_custom_call.1} parent=27 // pred_fallthru
          _
        %s186 = sand.u32 %s70, 1
        %s187 = scalar_lea.sflag [#allocation6], %s186
        %s188 = sand.u32 %s70, 1
        %s189 = smul.addr %s188, 2
        %s190 = scalar_lea.vmem [#allocation5], %s189
        // Predicated region
        $region33: #{tpu_custom_call.1} parent=27 // pred_check
          %p191 = pneg %p83
        $region34: #{tpu_custom_call.1} parent=27 // pred_check_branch
          %193 = sbr.rel (%p191) target = $region36
        $region35: #{tpu_custom_call.1} parent=27 // pred_region
          %194 = dma.done %s187, 32
        $region36: #{tpu_custom_call.1} parent=27 // pred_fallthru
          _
        %s195 = sand.u32 %s44, 1
        %s196 = scalar_lea.sflag [#allocation3], %s195
        %s197 = sand.u32 %s44, 1
        %s198 = smul.addr %s197, 4
        %s199 = scalar_lea.vmem [#allocation2], %s198
        %p200 = pneg %p57
        %p201 = pneg %p54
        %s202 = sand.u32 %s70, 1
        %s203 = scalar_lea.sflag [#allocation6], %s202
        %s204 = sand.u32 %s70, 1
        %s205 = smul.addr %s204, 2
        %s206 = scalar_lea.vmem [#allocation5], %s205
        %p207 = pneg %p83
        %p208 = pneg %p80
        %p209 = pneg %p111
        %p210 = pneg %p108
        %s211 = sand.u32 %s98, 1
        %s212 = scalar_lea.sflag [#allocation4], %s211
        %s213 = sand.u32 %s98, 1
        %s214 = smul.addr %s213, 4
        %s215 = scalar_lea.vmem [#allocation7], %s214
        %s216 = smul.u32 2, %s26
        %s217 = smul.u32 2, %s26
        %s218 = smul.u32 2, %s26
        %v219 = vld [vmem:[%s181] sm:$0xf]
        %v220 = vld [vmem:[%s190] sm:$0x3]
        %v222 = vlaneseq
        %v223 = vshrl.u32 %v222, 7
        %v224 = vsub.s32 0, %v223
        %v225 = vrot.slane %v220, %v224
        %v226 = vlaneseq
        %v227 = vshrl.u32 %v226, 7
        %v228 = vsub.s32 1, %v227
        %v229 = vrot.slane %v220, %v228
        %v230 = vcombine.low %v225, %v229
        %v232 = vunpack.c.l.s4 1983009808
        %v233 = vunpack.c.0.s8 %v232
        %v234 = vlaneseq
        %v235 = vshrl.u32 %v234, 7
        %v236 = vsub.s32 %v233, %v235
        %v237 = vrot.slane %v230, %v236
        %v239 = vadd.f32 %v219, %v237
        %240 = vst [vmem:[%s215] sm:$0xf] %v239
        %s241 = sand.u32 %s98, 1
        %s242 = scalar_lea.sflag [#allocation4], %s241
        %s243 = sand.u32 %s98, 1
        %s244 = smul.addr %s243, 4
        %s245 = scalar_lea.vmem [#allocation7], %s244
        // Predicated region
        $region37: #{tpu_custom_call.1} parent=27 // pred_check
          %p246 = pneg %p108
        $region38: #{tpu_custom_call.1} parent=27 // pred_check_branch
          %248 = sbr.rel (%p246) target = $region40
        $region39: #{tpu_custom_call.1} parent=27 // pred_region
          %s249 = smul.u32 2, %s26
          %s251 = ssub.s32 64, 64
          %252 = vsyncadd %s242, %s251
          %s253 = smul.addr %s27, 4
          %s254 = sadd.s32 %s249, %s253
          %s255 = smul.addr %s254, 32
          %s256 = scalar_lea.hbm %s2, %s255
          %s258 = sshll.u32 %s245, 4
          %s259 = int_to_ptr.vmem [resolvable:$true] %s258
          %261 = dma.vmem_to_hbm [thread:$0]  %s259, 64, %s256, %s242
        $region40: #{tpu_custom_call.1} parent=27 // pred_fallthru
          _
      $region28: #{tpu_custom_call.1} parent=5 // pred_fallthru
        _
      %p262 = scmp.le.s32.totalorder 2, %s17
      // Predicated region
      $region41: #{tpu_custom_call.1} parent=5 // pred_check
        %p263 = pneg %p262
      $region42: #{tpu_custom_call.1} parent=5 // pred_check_branch
        %265 = sbr.rel (%p263) target = $region44
      $region43: #{tpu_custom_call.1} parent=5 // pred_region
        %s266 = ssub.s32 %s17, 2
        // Predicated region
        $region45: #{tpu_custom_call.1} parent=43 // pred_check
          %p267 = pneg %p114
        $region46: #{tpu_custom_call.1} parent=43 // pred_check_branch
          %269 = sbr.rel (%p267) target = $region48
        $region47: #{tpu_custom_call.1} parent=43 // pred_region
          %s270 = sand.u32 %s99, 1
          %s271 = scalar_lea.sflag [#allocation4], %s270
          %s272 = sand.u32 %s99, 1
          %s273 = smul.addr %s272, 4
          %s274 = scalar_lea.vmem [#allocation7], %s273
          %275 = dma.done %s271, 64
        $region48: #{tpu_custom_call.1} parent=43 // pred_fallthru
          _
      $region44: #{tpu_custom_call.1} parent=5 // pred_fallthru
        _
    $region6: #{tpu_custom_call.1} parent=1 // loop_footer
      %s21 = sadd.s32 1, %s17
    $region7: #{tpu_custom_call.1} parent=1 // loop_footer_branch
      %16 = sbr.rel target = $region3
    $region8: #{tpu_custom_call.1} parent=1 // loop_exit
      _
    %276 = vsyncpa [#allocation3], 1
    %s277 = scalar_lea.sflag [#allocation3], 1
    %278 = vsyncpa %s277, 1
    %279 = vsyncpa [#allocation6], 1
    %s280 = scalar_lea.sflag [#allocation6], 1
    %281 = vsyncpa %s280, 1
    %282 = vsyncpa [#allocation4], 1
    %s283 = scalar_lea.sflag [#allocation4], 1
    %284 = vsyncpa %s283, 1

</llo_original>
